<compile_context>
chip_gen: v5e
topology: v5e:2x2
jax: 0.10.0
libtpu: 0.0.40
codegen_flags: <defaults>
</compile_context>

<pallas_src>
import jax
import jax.numpy as jnp
from jax.experimental import pallas as pl
from jax.experimental.pallas import tpu as pltpu

TAU = 0.1
INV_TAU = 1.0 / TAU


# ---------------------------------------------------------------------------
# Parameter folding (runs ONCE per parameter change, outside the hot path).
# ---------------------------------------------------------------------------
def fold_params(params):
    """Fold each activation-free 3-layer MLP into a single affine map."""
    W_s = params["sw1"] @ params["sw2"] @ params["sw3"]                                    # (N, N)
    b_s = (params["sb1"] @ params["sw2"] + params["sb2"]) @ params["sw3"] + params["sb3"]  # (1, N)
    b_tilde = (params["tb1"] @ params["tw2"] + params["tb2"]) @ params["tw3"] + params["tb3"]
    w_hat = jnp.exp(b_tilde)                                                               # (1, N)
    return (jnp.asarray(W_s, jnp.float32),
            jnp.asarray(w_hat, jnp.float32),
            jnp.asarray(b_s, jnp.float32))


# ---------------------------------------------------------------------------
# Kernel
# ---------------------------------------------------------------------------
def _make_kernel(TB, K, N):
    """Kernel body for one grid step of TB independent samples."""
    R = TB * K

    def kernel(s_ref, g_ref, w_ref, what_ref, bs_ref, out_ref):
        f32 = jnp.float32
        # ---- one flat MXU matmul for all TB samples ----------------------
        # (TB, K, N) -> (TB*K, N): regroups whole K=8-row sublane tiles only,
        # so the reshape is layout-free.
        s_flat = s_ref[...].reshape(R, N)
        s_new = jnp.dot(s_flat, w_ref[...], preferred_element_type=f32) + bs_ref[...]

        # ---- pi = softmax(s_new / tau, axis=-1), numerically stable -------
        logits = s_new * INV_TAU
        m = jnp.max(logits, axis=-1, keepdims=True)
        e = jnp.exp(logits - m)
        # exact reciprocal (not approx): pi feeds the argmax below, which must
        # match the reference; hoisting 1/denom out of the row is the win.
        pi = e * pl.reciprocal(jnp.sum(e, axis=-1, keepdims=True))

        # ---- hard gumbel-softmax forward value: one_hot(argmax(pi + g)) ---
        y = pi + g_ref[...].reshape(R, N)
        col = jax.lax.broadcasted_iota(jnp.int32, (R, N), 1)
        ymax = jnp.max(y, axis=-1, keepdims=True)
        # first-occurrence argmax (torch-like tie-break) using vector ops only
        first_idx = jnp.min(jnp.where(y == ymax, col, N), axis=-1, keepdims=True)
        z_hard = (col == first_idx).astype(f32)                       # (R, N)

        # ---- per-sample z = sum over K;  w = normalize(w_hat * z) ---------
        z = jnp.sum(z_hard.reshape(TB, K, N), axis=1)                 # (TB, N)
        w_upper = what_ref[...] * z                                   # (1,N)*(TB,N)
        # exact division so the sum-to-1 invariant holds to f32 precision
        out_ref[...] = w_upper / jnp.sum(w_upper, axis=-1, keepdims=True)

    return kernel


def _choose_tb(B, K):
    """Samples per grid step.

    Targets: TB*K >= 256 rows when B allows (fills v6e/v7x 256-row MXU; >=128
    covers v5e), per-step DMA in the multi-KiB regime, >=2 grid steps when
    possible (v7x megacore across the 'parallel' axis), and TB a multiple of 8
    so the (TB, N) output block is sublane-aligned.  VMEM stays tiny (a TB=256
    block is only ~256 KiB/input), far below even v7x's 64 MiB.
    """
    if B <= 8:
        return B                                    # one step, block == full array
    tb = min(max(2048 // max(K, 1), 8), (B + 1) // 2)
    return max(8, (tb // 8) * 8)


# ---------------------------------------------------------------------------
# Wrappers
# ---------------------------------------------------------------------------
@jax.jit
def snn_forward_batched(S_b, folded, gumbel_b):
    """B independent SNN forwards sharing (already folded) parameters.

    S_b, gumbel_b: (B, K, N) -> (B, N) portfolio weights (each row sums to 1).
    """
    W_eff, w_hat, b_s = folded
    B, K, N = S_b.shape
    TB = _choose_tb(B, K)
    n_steps = pl.cdiv(B, TB)
    B_pad = n_steps * TB

    S_b = S_b.astype(jnp.float32)
    gumbel_b = gumbel_b.astype(jnp.float32)
    if B_pad != B:
        pad = ((0, B_pad - B), (0, 0), (0, 0))
        S_b = jnp.pad(S_b, pad)
        gumbel_b = jnp.pad(gumbel_b, pad)

    out = pl.pallas_call(
        _make_kernel(TB, K, N),
        grid=(n_steps,),
        in_specs=[
            pl.BlockSpec((TB, K, N), lambda i: (i, 0, 0)),   # S (no wrapper concat)
            pl.BlockSpec((TB, K, N), lambda i: (i, 0, 0)),   # gumbel noise
            pl.BlockSpec((N, N), lambda i: (0, 0)),          # folded W_eff (constant)
            pl.BlockSpec((1, N), lambda i: (0, 0)),          # exp(b_eff_tilde)
            pl.BlockSpec((1, N), lambda i: (0, 0)),          # b_eff_S
        ],
        out_specs=pl.BlockSpec((TB, N), lambda i: (i, 0)),
        out_shape=jax.ShapeDtypeStruct((B_pad, N), jnp.float32),
        compiler_params=pltpu.CompilerParams(dimension_semantics=("parallel",)),
    )(S_b, gumbel_b, W_eff, w_hat, b_s)
    return out[:B]


def snn_forward(S, folded, gumbel):
    """Single SNN forward (the reference module's forward()). (K, N) -> (N,).

    Routed through the batched entry; if you need many independent forwards,
    call snn_forward_batched directly instead of looping over this.
    """
    return snn_forward_batched(S[None], folded, gumbel[None])[0]


# ---------------------------------------------------------------------------
# Pure-JAX reference (for validation) and torch-style init helpers
# ---------------------------------------------------------------------------
def snn_reference(S, folded, gumbel):
    W_eff, w_hat, b_s = folded
    s_new = jnp.dot(S.astype(jnp.float32), W_eff,
                    precision=jax.lax.Precision.HIGHEST) + b_s[0]
    pi = jax.nn.softmax(s_new * INV_TAU, axis=-1)
    y = pi + gumbel
    z = jnp.sum(jax.nn.one_hot(jnp.argmax(y, axis=-1), S.shape[-1],
                               dtype=jnp.float32), axis=0)
    w_upper = w_hat[0] * z
    return w_upper / jnp.sum(w_upper)


def xavier_uniform(key, shape):
    fan_out, fan_in = shape[0], shape[1]
    limit = jnp.sqrt(6.0 / (fan_in + fan_out))
    return jax.random.uniform(key, shape, jnp.float32, -limit, limit)


def linear_params(key, n_in, n_out):
    # torch.nn.Linear default init: U(-1/sqrt(in), 1/sqrt(in)) for W and b.
    # Weight stored pre-transposed as (in, out) so y = x @ W + b.
    kw, kb = jax.random.split(key)
    bound = 1.0 / jnp.sqrt(jnp.float32(n_in))
    W = jax.random.uniform(kw, (n_in, n_out), jnp.float32, -bound, bound)
    b = jax.random.uniform(kb, (1, n_out), jnp.float32, -bound, bound)
    return W, b


if __name__ == "__main__":
    N = 32   # num_assets
    K = 8    # number of selected assets / latent dim

    key = jax.random.PRNGKey(0)
    keys = jax.random.split(key, 10)

    # module state (torch: S = xavier_uniform_(randn(K, N)), w_tilde = zeros(N))
    S = xavier_uniform(keys[0], (K, N))

    params = {}
    params["tw1"], params["tb1"] = linear_params(keys[1], N, K)
    params["tw2"], params["tb2"] = linear_params(keys[2], K, K)
    params["tw3"], params["tb3"] = linear_params(keys[3], K, N)
    params["sw1"], params["sb1"] = linear_params(keys[4], N, K)
    params["sw2"], params["sb2"] = linear_params(keys[5], K, K)
    params["sw3"], params["sb3"] = linear_params(keys[6], K, N)

    # Fold both MLPs ONCE, outside the per-forward hot path (per review).
    folded = fold_params(params)

    # TODO(synk): torch's RNG stream for gumbel_softmax is not reproducible in
    # JAX; gumbel noise is sampled deterministically with jax.random.gumbel.
    gumbel = jax.random.gumbel(keys[7], (K, N), jnp.float32)

    # ---- single forward (the reference module's forward()) ----
    w = jax.block_until_ready(snn_forward(S, folded, gumbel))
    assert w.shape == (N,)
    assert bool(jnp.isfinite(w).all())
    assert abs(float(jnp.sum(w)) - 1.0) < 1e-4          # portfolio weights sum to 1
    assert int(jnp.sum(w > 0)) <= K                      # supported on at most K assets
    assert bool(jnp.allclose(w, snn_reference(S, folded, gumbel), atol=1e-5, rtol=1e-5))

    # ---- batched: 64 independent forwards, TB=32 samples/step, grid=(2,) ----
    B = 64
    S_b = jnp.stack([S] * B) + 0.01 * jax.random.normal(keys[8], (B, K, N), jnp.float32)
    gumbel_b = jax.random.gumbel(keys[9], (B, K, N), jnp.float32)
    w_b = jax.block_until_ready(snn_forward_batched(S_b, folded, gumbel_b))
    assert w_b.shape == (B, N)
    assert bool(jnp.isfinite(w_b).all())
    assert bool(jnp.allclose(jnp.sum(w_b, axis=-1), 1.0, atol=1e-4))
    assert int(jnp.max(jnp.sum(w_b > 0, axis=-1))) <= K
    # batched path vs single-sample path (same kernel math, different tiling)
    for i in (0, 1, B // 2, B - 1):
        w_i = snn_forward(S_b[i], folded, gumbel_b[i])
        assert bool(jnp.allclose(w_b[i], w_i, atol=1e-5, rtol=1e-5))
    # spot-check against the pure-JAX reference
    for i in (0, B - 1):
        w_i = snn_reference(S_b[i], folded, gumbel_b[i])
        assert bool(jnp.allclose(w_b[i], w_i, atol=1e-5, rtol=1e-5))

    print("KERNEL_OK")
</pallas_src>

<mosaic_0001>
module attributes {stable_mosaic.version = 11 : i64} {
  func.func @kernel(%arg0: i32, %arg1: memref<1x8x32xf32, #tpu.memory_space<vmem>>, %arg2: memref<1x8x32xf32, #tpu.memory_space<vmem>>, %arg3: memref<32x32xf32, #tpu.memory_space<vmem>>, %arg4: memref<1x32xf32, #tpu.memory_space<vmem>>, %arg5: memref<1x32xf32, #tpu.memory_space<vmem>>, %arg6: memref<1x32xf32, #tpu.memory_space<vmem>>) attributes {dimension_semantics = [#tpu.dimension_semantics<parallel>], iteration_bounds = array<i64: 1>, scalar_prefetch = 0 : i64, scratch_operands = 0 : i64, tpu.core_type = #tpu.core_type<tc>, window_params = [{transform_indices = @transform_0, window_bounds = array<i64: 1, 8, 32>}, {transform_indices = @transform_1, window_bounds = array<i64: 1, 8, 32>}, {pipeline_mode = #tpu.pipeline_mode<synchronous>, transform_indices = @transform_2, window_bounds = array<i64: 32, 32>}, {pipeline_mode = #tpu.pipeline_mode<synchronous>, transform_indices = @transform_3, window_bounds = array<i64: 1, 32>}, {pipeline_mode = #tpu.pipeline_mode<synchronous>, transform_indices = @transform_4, window_bounds = array<i64: 1, 32>}, {transform_indices = @transform_5, window_bounds = array<i64: 1, 32>}]} {
    %c0 = arith.constant 0 : index
    %c0_0 = arith.constant 0 : index
    %c0_1 = arith.constant 0 : index
    %0 = vector.load %arg1[%c0, %c0_0, %c0_1] : memref<1x8x32xf32, #tpu.memory_space<vmem>>, vector<1x8x32xf32>
    %1 = vector.shape_cast %0 : vector<1x8x32xf32> to vector<8x32xf32>
    %c0_2 = arith.constant 0 : index
    %c0_3 = arith.constant 0 : index
    %2 = vector.load %arg3[%c0_2, %c0_3] : memref<32x32xf32, #tpu.memory_space<vmem>>, vector<32x32xf32>
    %cst = arith.constant dense<0.000000e+00> : vector<8x32xf32>
    %3 = tpu.matmul %1, %2, %cst {dimension_numbers = #tpu.dot_dimension_numbers<[1], [0], [0], [1], [0, 0, 1, 1], [], []>} : vector<8x32xf32>, vector<32x32xf32>, vector<8x32xf32> -> vector<8x32xf32>
    %c0_4 = arith.constant 0 : index
    %c0_5 = arith.constant 0 : index
    %4 = vector.load %arg5[%c0_4, %c0_5] : memref<1x32xf32, #tpu.memory_space<vmem>>, vector<1x32xf32>
    %5 = vector.broadcast %4 : vector<1x32xf32> to vector<8x32xf32>
    %6 = arith.addf %3, %5 : vector<8x32xf32>
    %cst_6 = arith.constant 1.000000e+01 : f32
    %7 = vector.broadcast %cst_6 : f32 to vector<8x32xf32>
    %8 = arith.mulf %6, %7 : vector<8x32xf32>
    %cst_7 = arith.constant dense<0xFF800000> : vector<8xf32>
    %9 = vector.multi_reduction <maximumf>, %8, %cst_7 [1] : vector<8x32xf32> to vector<8xf32>
    %10 = vector.shape_cast %9 : vector<8xf32> to vector<8x1xf32>
    %11 = vector.broadcast %10 : vector<8x1xf32> to vector<8x32xf32>
    %12 = arith.subf %8, %11 : vector<8x32xf32>
    %13 = math.exp %12 : vector<8x32xf32>
    %cst_8 = arith.constant dense<0.000000e+00> : vector<8xf32>
    %14 = vector.multi_reduction <add>, %13, %cst_8 [1] : vector<8x32xf32> to vector<8xf32>
    %15 = vector.shape_cast %14 : vector<8xf32> to vector<8x1xf32>
    %16 = tpu.reciprocal %15 : vector<8x1xf32> -> vector<8x1xf32>
    %17 = vector.broadcast %16 : vector<8x1xf32> to vector<8x32xf32>
    %18 = arith.mulf %13, %17 : vector<8x32xf32>
    %c0_9 = arith.constant 0 : index
    %c0_10 = arith.constant 0 : index
    %c0_11 = arith.constant 0 : index
    %19 = vector.load %arg2[%c0_9, %c0_10, %c0_11] : memref<1x8x32xf32, #tpu.memory_space<vmem>>, vector<1x8x32xf32>
    %20 = vector.shape_cast %19 : vector<1x8x32xf32> to vector<8x32xf32>
    %21 = arith.addf %18, %20 : vector<8x32xf32>
    %22 = tpu.iota {dimensions = array<i32: 1>} : vector<8x32xi32>
    %cst_12 = arith.constant dense<0xFF800000> : vector<8xf32>
    %23 = vector.multi_reduction <maximumf>, %21, %cst_12 [1] : vector<8x32xf32> to vector<8xf32>
    %24 = vector.shape_cast %23 : vector<8xf32> to vector<8x1xf32>
    %25 = vector.broadcast %24 : vector<8x1xf32> to vector<8x32xf32>
    %26 = arith.cmpf oeq, %21, %25 : vector<8x32xf32>
    %c32_i32 = arith.constant 32 : i32
    %27 = vector.broadcast %c32_i32 : i32 to vector<8x32xi32>
    %28 = arith.select %26, %22, %27 : vector<8x32xi1>, vector<8x32xi32>
    %cst_13 = arith.constant dense<2147483647> : vector<8xi32>
    %29 = vector.multi_reduction <minsi>, %28, %cst_13 [1] : vector<8x32xi32> to vector<8xi32>
    %30 = vector.shape_cast %29 : vector<8xi32> to vector<8x1xi32>
    %31 = vector.broadcast %30 : vector<8x1xi32> to vector<8x32xi32>
    %32 = arith.cmpi eq, %22, %31 : vector<8x32xi32>
    %33 = arith.extui %32 : vector<8x32xi1> to vector<8x32xi32>
    %34 = arith.sitofp %33 : vector<8x32xi32> to vector<8x32xf32>
    %35 = vector.shape_cast %34 : vector<8x32xf32> to vector<1x8x32xf32>
    %cst_14 = arith.constant dense<0.000000e+00> : vector<1x32xf32>
    %36 = vector.multi_reduction <add>, %35, %cst_14 [1] : vector<1x8x32xf32> to vector<1x32xf32>
    %c0_15 = arith.constant 0 : index
    %c0_16 = arith.constant 0 : index
    %37 = vector.load %arg4[%c0_15, %c0_16] : memref<1x32xf32, #tpu.memory_space<vmem>>, vector<1x32xf32>
    %38 = arith.mulf %37, %36 : vector<1x32xf32>
    %cst_17 = arith.constant dense<0.000000e+00> : vector<1xf32>
    %39 = vector.multi_reduction <add>, %38, %cst_17 [1] : vector<1x32xf32> to vector<1xf32>
    %40 = vector.shape_cast %39 : vector<1xf32> to vector<1x1xf32>
    %41 = vector.broadcast %40 : vector<1x1xf32> to vector<1x32xf32>
    %42 = arith.divf %38, %41 : vector<1x32xf32>
    %c0_18 = arith.constant 0 : index
    %c0_19 = arith.constant 0 : index
    %43 = vector.load %arg6[%c0_18, %c0_19] : memref<1x32xf32, #tpu.memory_space<vmem>>, vector<1x32xf32>
    tpu.vector_store %arg6[%c0_18, %c0_19], %42 {strides = array<i32>} : memref<1x32xf32, #tpu.memory_space<vmem>>, vector<1x32xf32>,
    return
  }
  func.func @transform_0(%arg0: i32) -> (i32, i32, i32) {
    %c0_i32 = arith.constant 0 : i32
    %c0_i32_0 = arith.constant 0 : i32
    %c0_i32_1 = arith.constant 0 : i32
    return %arg0, %c0_i32, %c0_i32_0 : i32, i32, i32
  }
  func.func @transform_1(%arg0: i32) -> (i32, i32, i32) {
    %c0_i32 = arith.constant 0 : i32
    %c0_i32_0 = arith.constant 0 : i32
    %c0_i32_1 = arith.constant 0 : i32
    return %arg0, %c0_i32, %c0_i32_0 : i32, i32, i32
  }
  func.func @transform_2(%arg0: i32) -> (i32, i32) {
    %c0_i32 = arith.constant 0 : i32
    %c0_i32_0 = arith.constant 0 : i32
    %c0_i32_1 = arith.constant 0 : i32
    return %c0_i32, %c0_i32_0 : i32, i32
  }
  func.func @transform_3(%arg0: i32) -> (i32, i32) {
    %c0_i32 = arith.constant 0 : i32
    %c0_i32_0 = arith.constant 0 : i32
    %c0_i32_1 = arith.constant 0 : i32
    return %c0_i32, %c0_i32_0 : i32, i32
  }
  func.func @transform_4(%arg0: i32) -> (i32, i32) {
    %c0_i32 = arith.constant 0 : i32
    %c0_i32_0 = arith.constant 0 : i32
    %c0_i32_1 = arith.constant 0 : i32
    return %c0_i32, %c0_i32_0 : i32, i32
  }
  func.func @transform_5(%arg0: i32) -> (i32, i32) {
    %c0_i32 = arith.constant 0 : i32
    %c0_i32_0 = arith.constant 0 : i32
    return %arg0, %c0_i32 : i32, i32
  }
}

</mosaic_0001>

<llo_original>
// kernel: snn_forward_batched.1
$region0: #{snn_forward_batched.1}
  #allocation0 [shape = 'u32[]', space=smem, size = 0x4, offset = 0x4, fixed_abs, tag = 'smem constant byte address 0x4 - core index']
  #allocation1 [shape = 'u32[72,128]{1,0:T(1,128)}', space=vmem, size = 0x9000, scoped, tag = 'internal scratch']
  %s0 = inlined_call_operand.hbm [shape: f32[1,8,32], index: 0, kind: input, shape index: {}]
  %s1 = inlined_call_operand.hbm [shape: f32[1,8,32], index: 1, kind: input, shape index: {}]
  %s2 = inlined_call_operand.hbm [shape: f32[32,32], index: 2, kind: input, shape index: {}]
  %s3 = inlined_call_operand.vmem [shape: f32[1,32], index: 3, kind: input, shape index: {}]
  %s4 = inlined_call_operand.vmem [shape: f32[1,32], index: 4, kind: input, shape index: {}]
  %s5 = inlined_call_operand.hbm [shape: f32[1,32], index: 5, kind: output, shape index: {}]
  %s6 = sld [smem:[#allocation0]]
  $region42: #{snn_forward_batched.1} parent=0
    _
  %s8 = ssub.s32 1, %s6
  %s9 = scalar_select 0, %s8, %s6
  $region1: #{snn_forward_batched.1} parent=0
    #allocation2 [shape = 'u8[4096]{0}', space=vmem, size = 0x1000, scoped, tag = 'input window, operand 0, single buffered']
    #allocation3 [shape = 's32[1]{0}', space=sflag, size = 0x4, scoped, tag = 'scoped memory for snn_forward_batched.1']
    #allocation4 [shape = 's32[1]{0}', space=sflag, size = 0x4, scoped, tag = 'scoped memory for snn_forward_batched.1']
    #allocation5 [shape = 'u8[4096]{0}', space=vmem, size = 0x1000, scoped, tag = 'input window, operand 1, single buffered']
    #allocation6 [shape = 's32[1]{0}', space=sflag, size = 0x4, scoped, tag = 'scoped memory for snn_forward_batched.1']
    #allocation7 [shape = 'u8[16384]{0}', space=vmem, size = 0x4000, scoped, tag = 'input window, operand 2, single buffered']
    #allocation8 [shape = 'u8[512]{0}', space=vmem, size = 0x400, scoped, tag = 'output window, operand 0, single buffered']
    %10 = vsyncpa [#allocation3], 0
    %11 = vsyncpa [#allocation6], 0
    %12 = vsyncpa [#allocation4], 0
    // Predicated region
    $region2: #{snn_forward_batched.1} parent=1 // pred_check
      _
    $region3: #{snn_forward_batched.1} parent=1 // pred_check_branch
      %14 = sbr.rel (0) target = $region5
    $region4: #{snn_forward_batched.1} parent=1 // pred_region
      %16 = vsyncadd [#allocation3], 0
      %s18 = sshll.u32 %s0, 4
      %s19 = int_to_ptr.hbm [resolvable:$true] %s18
      %s20 = sshll.u32 [#allocation2], 4
      %s21 = int_to_ptr.vmem [resolvable:$true] %s20
      %23 = dma.hbm_to_vmem [thread:$0]  %s19, 128, %s21, [#allocation3]
    $region5: #{snn_forward_batched.1} parent=1 // pred_fallthru
      _
    // Predicated region
    $region6: #{snn_forward_batched.1} parent=1 // pred_check
      _
    $region7: #{snn_forward_batched.1} parent=1 // pred_check_branch
      %25 = sbr.rel (0) target = $region9
    $region8: #{snn_forward_batched.1} parent=1 // pred_region
      %27 = vsyncadd [#allocation6], 0
      %s29 = sshll.u32 %s1, 4
      %s30 = int_to_ptr.hbm [resolvable:$true] %s29
      %s31 = sshll.u32 [#allocation5], 4
      %s32 = int_to_ptr.vmem [resolvable:$true] %s31
      %34 = dma.hbm_to_vmem [thread:$0]  %s30, 128, %s32, [#allocation6]
    $region9: #{snn_forward_batched.1} parent=1 // pred_fallthru
      _
    // Predicated region
    $region10: #{snn_forward_batched.1} parent=1 // pred_check
      _
    $region11: #{snn_forward_batched.1} parent=1 // pred_check_branch
      %36 = sbr.rel (0) target = $region13
    $region12: #{snn_forward_batched.1} parent=1 // pred_region
      %38 = vsyncadd [#allocation6], 0
      %s39 = sshll.u32 %s2, 4
      %s40 = int_to_ptr.hbm [resolvable:$true] %s39
      %s41 = sshll.u32 [#allocation7], 4
      %s42 = int_to_ptr.vmem [resolvable:$true] %s41
      %47 = dma.hbm_to_vmem [thread:$0]  %s40, 512, %s42, [#allocation6], 128, 128, 8
    $region13: #{snn_forward_batched.1} parent=1 // pred_fallthru
      _
    // Predicated region
    $region14: #{snn_forward_batched.1} parent=1 // pred_check
      _
    $region15: #{snn_forward_batched.1} parent=1 // pred_check_branch
      %49 = sbr.rel (0) target = $region17
    $region16: #{snn_forward_batched.1} parent=1 // pred_region
      _
    $region17: #{snn_forward_batched.1} parent=1 // pred_fallthru
      _
    // Predicated region
    $region18: #{snn_forward_batched.1} parent=1 // pred_check
      _
    $region19: #{snn_forward_batched.1} parent=1 // pred_check_branch
      %51 = sbr.rel (0) target = $region21
    $region20: #{snn_forward_batched.1} parent=1 // pred_region
      _
    $region21: #{snn_forward_batched.1} parent=1 // pred_fallthru
      _
    // Predicated region
    $region22: #{snn_forward_batched.1} parent=1 // pred_check
      _
    $region23: #{snn_forward_batched.1} parent=1 // pred_check_branch
      %53 = sbr.rel (0) target = $region25
    $region24: #{snn_forward_batched.1} parent=1 // pred_region
      %55 = dma.done [#allocation3], 128
    $region25: #{snn_forward_batched.1} parent=1 // pred_fallthru
      _
    // Predicated region
    $region26: #{snn_forward_batched.1} parent=1 // pred_check
      _
    $region27: #{snn_forward_batched.1} parent=1 // pred_check_branch
      %57 = sbr.rel (0) target = $region29
    $region28: #{snn_forward_batched.1} parent=1 // pred_region
      %59 = dma.done [#allocation6], 128
    $region29: #{snn_forward_batched.1} parent=1 // pred_fallthru
      _
    // Predicated region
    $region30: #{snn_forward_batched.1} parent=1 // pred_check
      _
    $region31: #{snn_forward_batched.1} parent=1 // pred_check_branch
      %61 = sbr.rel (0) target = $region33
    $region32: #{snn_forward_batched.1} parent=1 // pred_region
      %63 = dma.done [#allocation6], 512
    $region33: #{snn_forward_batched.1} parent=1 // pred_fallthru
      _
    %v64 = vld [vmem:[#allocation2] sm:$0xff]
    %v65 = vld [vmem:[#allocation7] sm:$0xff]
    %v66 = vld [vmem:[#allocation7 + $0x8] sm:$0xff]
    %v67 = vld [vmem:[#allocation7 + $0x10] sm:$0xff]
    %v68 = vld [vmem:[#allocation7 + $0x18] sm:$0xff]
    %v69 = vld [vmem:[%s4] sm:$0x1]
    %v71 = vperm.slane %v69, 0
    %vm73 = vcmask 261120
    %v75 = vsel %vm73, %v64, 0
    %77 = vmatpush.msra.mxu0 0.0
    %78 = vmatpush.msra.mxu0 0.0
    %79 = vmatpush.msra.mxu0 0.0
    %80 = vmatpush.msra.mxu0 0.0
    %81 = vmatpush.msra.mxu0 0.0
    %82 = vmatpush.msra.mxu0 0.0
    %83 = vmatpush.msra.mxu0 0.0
    %84 = vmatpush.msra.mxu0 0.0
    %85 = vmatpush.msra.mxu0 0.0
    %86 = vmatpush.msra.mxu0 0.0
    %87 = vmatpush.msra.mxu0 0.0
    %88 = vmatpush.msra.mxu0 0.0
    %89 = vmatpush.msra.mxu0 %v68
    %90 = vmatpush.msra.mxu0 %v67
    %91 = vmatpush.msra.mxu0 %v66
    %92 = vmatpush.msra.mxu0 %v65
    %93 = vmatmul.f32.gmra.mxu0 %v75
    %v94 = vpop.f32.mrf.mxu0
    %v95 = vadd.f32 %v71, %v94
    %96 = vdwg.mxu0
    %v97 = vmul.f32 %v95, 10.0
    %v98 = vsel %vm73, %v97, -inf
    %99 = vmax.xlane.f32.xlu0 %v98
    %v100 = vpop.xlane.xlu0 %99
    %v101 = vsub.f32 %v97, %v100
    %v102 = vmul.f32 %v101, 1.442695
    %v103 = vpow.pop %v102
    %v104 = vsel %vm73, %v103, 0.0
    %105 = vadd.xlane.f32.xlu0 %v104
    %v106 = vpop.xlane.xlu0 %105
    %v107 = vrcp.pop %v106
    %v108 = vmul.f32 %v106, %v107
    %v109 = vsub.f32 1.0, %v108
    %v110 = vmul.f32 %v107, %v109
    %v111 = vadd.f32 %v107, %v110
    %vm112 = vweird.f32 %v106
    %vm113 = vweird.f32 %v107
    %vm114 = vmor %vm112, %vm113
    %v115 = vsel %vm114, %v107, %v111
    %v116 = vand.u32 2147483647, %v106
    %vm117 = vcmp.eq.f32.partialorder %v116, 8.507059e+37
    %v118 = vand.u32 %v106, 2147483648
    %v119 = vor.u32 1.1754944e-38, %v118
    %v120 = vsel %vm117, %v119, %v115
    %v121 = vmul.f32 %v103, %v120
    %v122 = vld [vmem:[#allocation5] sm:$0xff]
    %v123 = vadd.f32 %v121, %v122
    %v124 = vlaneseq
    %v125 = vand.u32 %v124, 127
    %v126 = vsel %vm73, %v123, -inf
    %127 = vmax.xlane.f32.xlu0 %v126
    %v128 = vpop.xlane.xlu0 %127
    %vm129 = vcmp.eq.f32.partialorder %v123, %v128
    %v130 = vsel %vm129, %v125, 32
    %v131 = vsel %vm73, %v130, 2147483647
    %v132 = vand.u32 %v131, 65535
    %v133 = vshra.s32 %v131, 16
    %v134 = vcvt.s32.f32 %v132
    %v135 = vcvt.s32.f32 %v133
    %136 = vmin.xlane.f32.xlu0 %v135
    %v137 = vpop.xlane.xlu0 %136
    %vm138 = vcmp.eq.f32.partialorder %v135, %v137
    %v139 = vsel %vm138, %v134, inf
    %140 = vmin.xlane.f32.xlu0 %v139
    %v141 = vpop.xlane.xlu0 %140
    %v142 = vcvt.f32.s32 %v141
    %v143 = vcvt.f32.s32 %v137
    %v144 = vshll.u32 %v143, 16
    %v145 = vadd.s32 %v144, %v142
    %vm146 = vcmp.eq.s32.totalorder %v125, %v145
    %v147 = vsel %vm146, 1, 0
    %v148 = vcvt.s32.f32 %v147
    %v149 = vsel %vm73, %v148, 0.0
    %v150 = vrot.slane %v149, 4
    %v151 = vadd.f32 %v149, %v150
    %v152 = vrot.slane %v151, 2
    %v153 = vadd.f32 %v151, %v152
    %v154 = vrot.slane %v153, 1
    %v155 = vadd.f32 %v153, %v154
    %v156 = vld [vmem:[%s3] sm:$0x1]
    %v157 = vmul.f32 %v156, %v155
    %vm158 = vcmask 253952
    %v159 = vsel %vm158, %v157, 0.0
    %160 = vadd.xlane.f32.xlu0 %v159
    %v161 = vpop.xlane.xlu0 %160
    %v162 = vrcp.pop %v161
    %v163 = vmul.f32 %v161, %v162
    %v164 = vsub.f32 1.0, %v163
    %v165 = vmul.f32 %v162, %v164
    %v166 = vadd.f32 %v162, %v165
    %vm167 = vweird.f32 %v161
    %vm168 = vweird.f32 %v162
    %vm169 = vmor %vm167, %vm168
    %v170 = vsel %vm169, %v162, %v166
    %v171 = vand.u32 2147483647, %v161
    %vm172 = vcmp.eq.f32.partialorder %v171, 8.507059e+37
    %v173 = vand.u32 %v161, 2147483648
    %v174 = vor.u32 1.1754944e-38, %v173
    %v175 = vsel %vm172, %v174, %v170
    %v176 = vmul.f32 %v157, %v175
    %177 = vst.msk [vmem:[#allocation8] sm:$0x1] %vm158, %v176
    // Predicated region
    $region34: #{snn_forward_batched.1} parent=1 // pred_check
      _
    $region35: #{snn_forward_batched.1} parent=1 // pred_check_branch
      %179 = sbr.rel (0) target = $region37
    $region36: #{snn_forward_batched.1} parent=1 // pred_region
      %181 = vsyncadd [#allocation4], 0
      %s183 = sshll.u32 [#allocation8], 4
      %s184 = int_to_ptr.vmem [resolvable:$true] %s183
      %s185 = sshll.u32 %s5, 4
      %s186 = int_to_ptr.hbm [resolvable:$true] %s185
      %188 = dma.vmem_to_hbm [thread:$0]  %s184, 16, %s186, [#allocation4]
    $region37: #{snn_forward_batched.1} parent=1 // pred_fallthru
      _
    // Predicated region
    $region38: #{snn_forward_batched.1} parent=1 // pred_check
      _
    $region39: #{snn_forward_batched.1} parent=1 // pred_check_branch
      %190 = sbr.rel (0) target = $region41
    $region40: #{snn_forward_batched.1} parent=1 // pred_region
      %192 = dma.done [#allocation4], 16
    $region41: #{snn_forward_batched.1} parent=1 // pred_fallthru
      _
    %193 = vsyncpa [#allocation3], 1
    %194 = vsyncpa [#allocation6], 1
    %195 = vsyncpa [#allocation4], 1

</llo_original>
